<compile_context>
chip_gen: v7x
topology: tpu7x:2x2x1
jax: 0.10.0
libtpu: 0.0.40
codegen_flags: <defaults>
</compile_context>

<pallas_src>
import functools

import jax
import jax.numpy as jnp
from jax.experimental import pallas as pl
from jax.experimental.pallas import tpu as pltpu

_LANE = 128     # lane-axis granularity
_SUBLANE = 8    # sublane-axis granularity


def _round_up(n: int, m: int) -> int:
    return ((n + m - 1) // m) * m


def _three_layer_pca_kernel(
    x_ref,
    w1_ref, b1_ref, w2_ref, b2_ref, w3_ref, b3_ref,   # encoder
    w4_ref, b4_ref, w5_ref, b5_ref, w6_ref, b6_ref,   # decoder
    o_ref,
):
    """One batch tile of the autoencoder forward pass.

    x_ref: bf16 [TB, Fp]; weights bf16 [in_p, out_p]; biases f32 [1, out_p];
    o_ref: f32 [TB, Fp].  All lane dims are multiples of 128.
    """

    def layer(h_bf16, w_ref, b_ref, relu):
        # bf16 x bf16 matmul on the MXU, accumulate in f32.
        acc = jnp.dot(h_bf16, w_ref[...], preferred_element_type=jnp.float32)
        acc = acc + b_ref[...]          # bias add in f32 (VPU)
        if relu:
            acc = jnp.maximum(acc, 0.0)  # ReLU in f32 (VPU)
        return acc

    h = x_ref[...]                                               # bf16 [TB, Fp]
    # Encoder: Linear -> ReLU -> Linear -> ReLU -> Linear
    h = layer(h, w1_ref, b1_ref, True).astype(jnp.bfloat16)
    h = layer(h, w2_ref, b2_ref, True).astype(jnp.bfloat16)
    z = layer(h, w3_ref, b3_ref, False).astype(jnp.bfloat16)     # bottleneck (no ReLU)
    # Decoder: Linear -> ReLU -> Linear -> ReLU -> Linear
    h = layer(z, w4_ref, b4_ref, True).astype(jnp.bfloat16)
    h = layer(h, w5_ref, b5_ref, True).astype(jnp.bfloat16)
    y = layer(h, w6_ref, b6_ref, False)                          # f32
    o_ref[...] = y.astype(o_ref.dtype)


def init_params(key, feature_size: int, hidden_size: int, output_size: int):
    """Deterministic init mirroring nn.Linear defaults; PyTorch layout [out, in] / [out]."""
    dims = [
        (hidden_size, feature_size),   # encoder[0]
        (hidden_size, hidden_size),    # encoder[2]
        (output_size, hidden_size),    # encoder[4]
        (hidden_size, output_size),    # decoder[0]
        (hidden_size, hidden_size),    # decoder[2]
        (feature_size, hidden_size),   # decoder[4]
    ]
    params = []
    for (out_d, in_d) in dims:
        key, kw, kb = jax.random.split(key, 3)
        bound = 1.0 / jnp.sqrt(float(in_d))
        w = jax.random.uniform(kw, (out_d, in_d), jnp.float32, -bound, bound)
        b = jax.random.uniform(kb, (out_d,), jnp.float32, -bound, bound)
        params.append((w, b))
    return params


def prepare_params(params):
    """One-time parameter prep (do NOT call per forward):
    transpose to [in, out], zero-pad both dims to multiples of 128, cast weights to bf16,
    keep biases f32 as [1, out_p]."""
    prepped = []
    for (w, b) in params:
        out_d, in_d = w.shape
        in_p = _round_up(in_d, _LANE)
        out_p = _round_up(out_d, _LANE)
        wt = jnp.zeros((in_p, out_p), jnp.bfloat16)
        wt = wt.at[:in_d, :out_d].set(
            jnp.asarray(w, jnp.float32).T.astype(jnp.bfloat16))
        bp = jnp.zeros((1, out_p), jnp.float32)
        bp = bp.at[0, :out_d].set(jnp.asarray(b, jnp.float32))
        prepped.append(wt)
        prepped.append(bp)
    return tuple(prepped)


@functools.partial(jax.jit, static_argnames=("tb",))
def three_layer_pca_forward(x, prepped, tb: int = 32):
    """x: f32 [B, feature_size]; prepped: output of prepare_params. Returns f32 [B, F]."""
    assert tb % _SUBLANE == 0, "batch tile must be a multiple of 8"
    B, F = x.shape
    Fp_in = prepped[0].shape[0]    # padded feature size (input of first layer)
    Fp_out = prepped[-2].shape[1]  # padded feature size (output of last layer)
    Bp = _round_up(B, tb)

    # Pad + cast activations once (zeros in padded rows/cols are semantically inert).
    x_p = jnp.zeros((Bp, Fp_in), jnp.bfloat16)
    x_p = x_p.at[:B, :F].set(x.astype(jnp.bfloat16))

    def _const_spec(shape):
        # Same block every grid step -> fetched once, stays VMEM-resident.
        return pl.BlockSpec(shape, lambda i: (0, 0))

    in_specs = [pl.BlockSpec((tb, Fp_in), lambda i: (i, 0))]   # x: tiled over batch
    in_specs += [_const_spec(a.shape) for a in prepped]        # weights/biases: pinned

    out = pl.pallas_call(
        _three_layer_pca_kernel,
        out_shape=jax.ShapeDtypeStruct((Bp, Fp_out), jnp.float32),
        grid=(Bp // tb,),
        in_specs=in_specs,
        out_specs=pl.BlockSpec((tb, Fp_out), lambda i: (i, 0)),
        compiler_params=pltpu.CompilerParams(
            # Batch tiles are independent -> shard across v7x's 2 TensorCores.
            dimension_semantics=("parallel",),
        ),
    )(x_p, *prepped)

    return out[:B, :F]


def _reference_forward(x, params, bf16_matmul: bool):
    """Pure-JAX reference mirroring the PyTorch module. bf16_matmul=True mimics the
    kernel's mixed-precision path (bf16 inputs, f32 accumulate)."""
    h = jnp.asarray(x, jnp.float32)
    for i, (w, b) in enumerate(params):
        wt = jnp.asarray(w, jnp.float32).T
        if bf16_matmul:
            h = jnp.dot(h.astype(jnp.bfloat16), wt.astype(jnp.bfloat16),
                        preferred_element_type=jnp.float32) + b
        else:
            h = jnp.dot(h, wt) + b
        if i in (0, 1, 3, 4):   # ReLU after encoder[0,2] and decoder[0,2]
            h = jnp.maximum(h, 0.0)
    return h


if __name__ == "__main__":
    # Small shapes consistent with the module: x is [batch, feature_size].
    batch, feature_size, hidden_size, output_size = 64, 32, 32, 16
    tb = 32  # batch tile -> grid of 2 steps (pipelined, parallel across TCs on v7x)

    key = jax.random.PRNGKey(0)
    key, kx = jax.random.split(key)
    x = jax.random.normal(kx, (batch, feature_size), jnp.float32)

    params = init_params(key, feature_size, hidden_size, output_size)
    prepped = prepare_params(params)   # one-time: transpose + pad + bf16 cast

    out = three_layer_pca_forward(x, prepped, tb=tb)
    out = jax.block_until_ready(out)
    assert out.shape == (batch, feature_size)

    # Tight check vs a reference that follows the same mixed-precision path.
    ref_mixed = _reference_forward(x, params, bf16_matmul=True)
    assert jnp.allclose(out, ref_mixed, atol=2e-3, rtol=2e-3), "mismatch vs mixed-precision ref"

    # Loose check vs the exact f32 PyTorch-equivalent math (bf16 rounding tolerance).
    ref_f32 = _reference_forward(x, params, bf16_matmul=False)
    assert jnp.allclose(out, ref_f32, atol=1e-1, rtol=1e-1), "mismatch vs f32 reference"

    print("KERNEL_OK")
</pallas_src>

<mosaic_0001>
module attributes {stable_mosaic.version = 11 : i64} {
  func.func @_three_layer_pca_kernel(%arg0: i32, %arg1: memref<32x128xbf16, #tpu.memory_space<vmem>>, %arg2: memref<128x128xbf16, #tpu.memory_space<vmem>>, %arg3: memref<1x128xf32, #tpu.memory_space<vmem>>, %arg4: memref<128x128xbf16, #tpu.memory_space<vmem>>, %arg5: memref<1x128xf32, #tpu.memory_space<vmem>>, %arg6: memref<128x128xbf16, #tpu.memory_space<vmem>>, %arg7: memref<1x128xf32, #tpu.memory_space<vmem>>, %arg8: memref<128x128xbf16, #tpu.memory_space<vmem>>, %arg9: memref<1x128xf32, #tpu.memory_space<vmem>>, %arg10: memref<128x128xbf16, #tpu.memory_space<vmem>>, %arg11: memref<1x128xf32, #tpu.memory_space<vmem>>, %arg12: memref<128x128xbf16, #tpu.memory_space<vmem>>, %arg13: memref<1x128xf32, #tpu.memory_space<vmem>>, %arg14: memref<32x128xf32, #tpu.memory_space<vmem>>) attributes {dimension_semantics = [#tpu.dimension_semantics<parallel>], iteration_bounds = array<i64: 2>, scalar_prefetch = 0 : i64, scratch_operands = 0 : i64, tpu.core_type = #tpu.core_type<tc>, window_params = [{transform_indices = @transform_0, window_bounds = array<i64: 32, 128>}, {pipeline_mode = #tpu.pipeline_mode<synchronous>, transform_indices = @transform_1, window_bounds = array<i64: 128, 128>}, {pipeline_mode = #tpu.pipeline_mode<synchronous>, transform_indices = @transform_2, window_bounds = array<i64: 1, 128>}, {pipeline_mode = #tpu.pipeline_mode<synchronous>, transform_indices = @transform_3, window_bounds = array<i64: 128, 128>}, {pipeline_mode = #tpu.pipeline_mode<synchronous>, transform_indices = @transform_4, window_bounds = array<i64: 1, 128>}, {pipeline_mode = #tpu.pipeline_mode<synchronous>, transform_indices = @transform_5, window_bounds = array<i64: 128, 128>}, {pipeline_mode = #tpu.pipeline_mode<synchronous>, transform_indices = @transform_6, window_bounds = array<i64: 1, 128>}, {pipeline_mode = #tpu.pipeline_mode<synchronous>, transform_indices = @transform_7, window_bounds = array<i64: 128, 128>}, {pipeline_mode = #tpu.pipeline_mode<synchronous>, transform_indices = @transform_8, window_bounds = array<i64: 1, 128>}, {pipeline_mode = #tpu.pipeline_mode<synchronous>, transform_indices = @transform_9, window_bounds = array<i64: 128, 128>}, {pipeline_mode = #tpu.pipeline_mode<synchronous>, transform_indices = @transform_10, window_bounds = array<i64: 1, 128>}, {pipeline_mode = #tpu.pipeline_mode<synchronous>, transform_indices = @transform_11, window_bounds = array<i64: 128, 128>}, {pipeline_mode = #tpu.pipeline_mode<synchronous>, transform_indices = @transform_12, window_bounds = array<i64: 1, 128>}, {transform_indices = @transform_13, window_bounds = array<i64: 32, 128>}]} {
    %c0 = arith.constant 0 : index
    %c0_0 = arith.constant 0 : index
    %0 = vector.load %arg1[%c0, %c0_0] : memref<32x128xbf16, #tpu.memory_space<vmem>>, vector<32x128xbf16>
    %c0_1 = arith.constant 0 : index
    %c0_2 = arith.constant 0 : index
    %1 = vector.load %arg2[%c0_1, %c0_2] : memref<128x128xbf16, #tpu.memory_space<vmem>>, vector<128x128xbf16>
    %cst = arith.constant dense<0.000000e+00> : vector<32x128xf32>
    %2 = tpu.matmul %0, %1, %cst {dimension_numbers = #tpu.dot_dimension_numbers<[1], [0], [0], [1], [0, 0, 1, 1], [], []>} : vector<32x128xbf16>, vector<128x128xbf16>, vector<32x128xf32> -> vector<32x128xf32>
    %c0_3 = arith.constant 0 : index
    %c0_4 = arith.constant 0 : index
    %3 = vector.load %arg3[%c0_3, %c0_4] : memref<1x128xf32, #tpu.memory_space<vmem>>, vector<1x128xf32>
    %4 = vector.broadcast %3 : vector<1x128xf32> to vector<32x128xf32>
    %5 = arith.addf %2, %4 : vector<32x128xf32>
    %cst_5 = arith.constant 0.000000e+00 : f32
    %6 = vector.broadcast %cst_5 : f32 to vector<32x128xf32>
    %7 = arith.maximumf %5, %6 : vector<32x128xf32>
    %8 = arith.truncf %7 : vector<32x128xf32> to vector<32x128xbf16>
    %c0_6 = arith.constant 0 : index
    %c0_7 = arith.constant 0 : index
    %9 = vector.load %arg4[%c0_6, %c0_7] : memref<128x128xbf16, #tpu.memory_space<vmem>>, vector<128x128xbf16>
    %cst_8 = arith.constant dense<0.000000e+00> : vector<32x128xf32>
    %10 = tpu.matmul %8, %9, %cst_8 {dimension_numbers = #tpu.dot_dimension_numbers<[1], [0], [0], [1], [0, 0, 1, 1], [], []>} : vector<32x128xbf16>, vector<128x128xbf16>, vector<32x128xf32> -> vector<32x128xf32>
    %c0_9 = arith.constant 0 : index
    %c0_10 = arith.constant 0 : index
    %11 = vector.load %arg5[%c0_9, %c0_10] : memref<1x128xf32, #tpu.memory_space<vmem>>, vector<1x128xf32>
    %12 = vector.broadcast %11 : vector<1x128xf32> to vector<32x128xf32>
    %13 = arith.addf %10, %12 : vector<32x128xf32>
    %cst_11 = arith.constant 0.000000e+00 : f32
    %14 = vector.broadcast %cst_11 : f32 to vector<32x128xf32>
    %15 = arith.maximumf %13, %14 : vector<32x128xf32>
    %16 = arith.truncf %15 : vector<32x128xf32> to vector<32x128xbf16>
    %c0_12 = arith.constant 0 : index
    %c0_13 = arith.constant 0 : index
    %17 = vector.load %arg6[%c0_12, %c0_13] : memref<128x128xbf16, #tpu.memory_space<vmem>>, vector<128x128xbf16>
    %cst_14 = arith.constant dense<0.000000e+00> : vector<32x128xf32>
    %18 = tpu.matmul %16, %17, %cst_14 {dimension_numbers = #tpu.dot_dimension_numbers<[1], [0], [0], [1], [0, 0, 1, 1], [], []>} : vector<32x128xbf16>, vector<128x128xbf16>, vector<32x128xf32> -> vector<32x128xf32>
    %c0_15 = arith.constant 0 : index
    %c0_16 = arith.constant 0 : index
    %19 = vector.load %arg7[%c0_15, %c0_16] : memref<1x128xf32, #tpu.memory_space<vmem>>, vector<1x128xf32>
    %20 = vector.broadcast %19 : vector<1x128xf32> to vector<32x128xf32>
    %21 = arith.addf %18, %20 : vector<32x128xf32>
    %22 = arith.truncf %21 : vector<32x128xf32> to vector<32x128xbf16>
    %c0_17 = arith.constant 0 : index
    %c0_18 = arith.constant 0 : index
    %23 = vector.load %arg8[%c0_17, %c0_18] : memref<128x128xbf16, #tpu.memory_space<vmem>>, vector<128x128xbf16>
    %cst_19 = arith.constant dense<0.000000e+00> : vector<32x128xf32>
    %24 = tpu.matmul %22, %23, %cst_19 {dimension_numbers = #tpu.dot_dimension_numbers<[1], [0], [0], [1], [0, 0, 1, 1], [], []>} : vector<32x128xbf16>, vector<128x128xbf16>, vector<32x128xf32> -> vector<32x128xf32>
    %c0_20 = arith.constant 0 : index
    %c0_21 = arith.constant 0 : index
    %25 = vector.load %arg9[%c0_20, %c0_21] : memref<1x128xf32, #tpu.memory_space<vmem>>, vector<1x128xf32>
    %26 = vector.broadcast %25 : vector<1x128xf32> to vector<32x128xf32>
    %27 = arith.addf %24, %26 : vector<32x128xf32>
    %cst_22 = arith.constant 0.000000e+00 : f32
    %28 = vector.broadcast %cst_22 : f32 to vector<32x128xf32>
    %29 = arith.maximumf %27, %28 : vector<32x128xf32>
    %30 = arith.truncf %29 : vector<32x128xf32> to vector<32x128xbf16>
    %c0_23 = arith.constant 0 : index
    %c0_24 = arith.constant 0 : index
    %31 = vector.load %arg10[%c0_23, %c0_24] : memref<128x128xbf16, #tpu.memory_space<vmem>>, vector<128x128xbf16>
    %cst_25 = arith.constant dense<0.000000e+00> : vector<32x128xf32>
    %32 = tpu.matmul %30, %31, %cst_25 {dimension_numbers = #tpu.dot_dimension_numbers<[1], [0], [0], [1], [0, 0, 1, 1], [], []>} : vector<32x128xbf16>, vector<128x128xbf16>, vector<32x128xf32> -> vector<32x128xf32>
    %c0_26 = arith.constant 0 : index
    %c0_27 = arith.constant 0 : index
    %33 = vector.load %arg11[%c0_26, %c0_27] : memref<1x128xf32, #tpu.memory_space<vmem>>, vector<1x128xf32>
    %34 = vector.broadcast %33 : vector<1x128xf32> to vector<32x128xf32>
    %35 = arith.addf %32, %34 : vector<32x128xf32>
    %cst_28 = arith.constant 0.000000e+00 : f32
    %36 = vector.broadcast %cst_28 : f32 to vector<32x128xf32>
    %37 = arith.maximumf %35, %36 : vector<32x128xf32>
    %38 = arith.truncf %37 : vector<32x128xf32> to vector<32x128xbf16>
    %c0_29 = arith.constant 0 : index
    %c0_30 = arith.constant 0 : index
    %39 = vector.load %arg12[%c0_29, %c0_30] : memref<128x128xbf16, #tpu.memory_space<vmem>>, vector<128x128xbf16>
    %cst_31 = arith.constant dense<0.000000e+00> : vector<32x128xf32>
    %40 = tpu.matmul %38, %39, %cst_31 {dimension_numbers = #tpu.dot_dimension_numbers<[1], [0], [0], [1], [0, 0, 1, 1], [], []>} : vector<32x128xbf16>, vector<128x128xbf16>, vector<32x128xf32> -> vector<32x128xf32>
    %c0_32 = arith.constant 0 : index
    %c0_33 = arith.constant 0 : index
    %41 = vector.load %arg13[%c0_32, %c0_33] : memref<1x128xf32, #tpu.memory_space<vmem>>, vector<1x128xf32>
    %42 = vector.broadcast %41 : vector<1x128xf32> to vector<32x128xf32>
    %43 = arith.addf %40, %42 : vector<32x128xf32>
    %c0_34 = arith.constant 0 : index
    %c0_35 = arith.constant 0 : index
    %44 = vector.load %arg14[%c0_34, %c0_35] : memref<32x128xf32, #tpu.memory_space<vmem>>, vector<32x128xf32>
    tpu.vector_store %arg14[%c0_34, %c0_35], %43 {strides = array<i32>} : memref<32x128xf32, #tpu.memory_space<vmem>>, vector<32x128xf32>,
    return
  }
  func.func @transform_0(%arg0: i32) -> (i32, i32) {
    %c0_i32 = arith.constant 0 : i32
    %c0_i32_0 = arith.constant 0 : i32
    return %arg0, %c0_i32 : i32, i32
  }
  func.func @transform_1(%arg0: i32) -> (i32, i32) {
    %c0_i32 = arith.constant 0 : i32
    %c0_i32_0 = arith.constant 0 : i32
    %c0_i32_1 = arith.constant 0 : i32
    return %c0_i32, %c0_i32_0 : i32, i32
  }
  func.func @transform_2(%arg0: i32) -> (i32, i32) {
    %c0_i32 = arith.constant 0 : i32
    %c0_i32_0 = arith.constant 0 : i32
    %c0_i32_1 = arith.constant 0 : i32
    return %c0_i32, %c0_i32_0 : i32, i32
  }
  func.func @transform_3(%arg0: i32) -> (i32, i32) {
    %c0_i32 = arith.constant 0 : i32
    %c0_i32_0 = arith.constant 0 : i32
    %c0_i32_1 = arith.constant 0 : i32
    return %c0_i32, %c0_i32_0 : i32, i32
  }
  func.func @transform_4(%arg0: i32) -> (i32, i32) {
    %c0_i32 = arith.constant 0 : i32
    %c0_i32_0 = arith.constant 0 : i32
    %c0_i32_1 = arith.constant 0 : i32
    return %c0_i32, %c0_i32_0 : i32, i32
  }
  func.func @transform_5(%arg0: i32) -> (i32, i32) {
    %c0_i32 = arith.constant 0 : i32
    %c0_i32_0 = arith.constant 0 : i32
    %c0_i32_1 = arith.constant 0 : i32
    return %c0_i32, %c0_i32_0 : i32, i32
  }
  func.func @transform_6(%arg0: i32) -> (i32, i32) {
    %c0_i32 = arith.constant 0 : i32
    %c0_i32_0 = arith.constant 0 : i32
    %c0_i32_1 = arith.constant 0 : i32
    return %c0_i32, %c0_i32_0 : i32, i32
  }
  func.func @transform_7(%arg0: i32) -> (i32, i32) {
    %c0_i32 = arith.constant 0 : i32
    %c0_i32_0 = arith.constant 0 : i32
    %c0_i32_1 = arith.constant 0 : i32
    return %c0_i32, %c0_i32_0 : i32, i32
  }
  func.func @transform_8(%arg0: i32) -> (i32, i32) {
    %c0_i32 = arith.constant 0 : i32
    %c0_i32_0 = arith.constant 0 : i32
    %c0_i32_1 = arith.constant 0 : i32
    return %c0_i32, %c0_i32_0 : i32, i32
  }
  func.func @transform_9(%arg0: i32) -> (i32, i32) {
    %c0_i32 = arith.constant 0 : i32
    %c0_i32_0 = arith.constant 0 : i32
    %c0_i32_1 = arith.constant 0 : i32
    return %c0_i32, %c0_i32_0 : i32, i32
  }
  func.func @transform_10(%arg0: i32) -> (i32, i32) {
    %c0_i32 = arith.constant 0 : i32
    %c0_i32_0 = arith.constant 0 : i32
    %c0_i32_1 = arith.constant 0 : i32
    return %c0_i32, %c0_i32_0 : i32, i32
  }
  func.func @transform_11(%arg0: i32) -> (i32, i32) {
    %c0_i32 = arith.constant 0 : i32
    %c0_i32_0 = arith.constant 0 : i32
    %c0_i32_1 = arith.constant 0 : i32
    return %c0_i32, %c0_i32_0 : i32, i32
  }
  func.func @transform_12(%arg0: i32) -> (i32, i32) {
    %c0_i32 = arith.constant 0 : i32
    %c0_i32_0 = arith.constant 0 : i32
    %c0_i32_1 = arith.constant 0 : i32
    return %c0_i32, %c0_i32_0 : i32, i32
  }
  func.func @transform_13(%arg0: i32) -> (i32, i32) {
    %c0_i32 = arith.constant 0 : i32
    %c0_i32_0 = arith.constant 0 : i32
    return %arg0, %c0_i32 : i32, i32
  }
}

</mosaic_0001>

<llo_original>
// kernel: three_layer_pca_forward.1
$region0: #{three_layer_pca_forward.1}
  #allocation0 [shape = 'u32[]', space=smem, size = 0x4, offset = 0x4, fixed_abs, tag = 'smem constant byte address 0x4 - core index']
  #allocation1 [shape = 'u32[144,128]{1,0:T(1,128)}', space=vmem, size = 0x12000, scoped, tag = 'internal scratch']
  %s0 = inlined_call_operand.vmem [shape: bf16[64,128], index: 0, kind: input, shape index: {}]
  %s1 = inlined_call_operand.vmem [shape: bf16[128,128], index: 1, kind: input, shape index: {}]
  %s2 = inlined_call_operand.vmem [shape: f32[1,128], index: 2, kind: input, shape index: {}]
  %s3 = inlined_call_operand.vmem [shape: bf16[128,128], index: 3, kind: input, shape index: {}]
  %s4 = inlined_call_operand.vmem [shape: f32[1,128], index: 4, kind: input, shape index: {}]
  %s5 = inlined_call_operand.vmem [shape: bf16[128,128], index: 5, kind: input, shape index: {}]
  %s6 = inlined_call_operand.vmem [shape: f32[1,128], index: 6, kind: input, shape index: {}]
  %s7 = inlined_call_operand.hbm [shape: bf16[128,128], index: 7, kind: input, shape index: {}]
  %s8 = inlined_call_operand.vmem [shape: f32[1,128], index: 8, kind: input, shape index: {}]
  %s9 = inlined_call_operand.hbm [shape: bf16[128,128], index: 9, kind: input, shape index: {}]
  %s10 = inlined_call_operand.vmem [shape: f32[1,128], index: 10, kind: input, shape index: {}]
  %s11 = inlined_call_operand.hbm [shape: bf16[128,128], index: 11, kind: input, shape index: {}]
  %s12 = inlined_call_operand.vmem [shape: f32[1,128], index: 12, kind: input, shape index: {}]
  %s13 = inlined_call_operand.vmem [shape: f32[64,128], index: 13, kind: output, shape index: {}]
  %s14 = sld [smem:[#allocation0]]
  $region97: #{three_layer_pca_forward.1} parent=0
    _
  %s16 = ssub.s32 1, %s14
  %s17 = scalar_select 0, %s16, %s14
  $region1: #{three_layer_pca_forward.1} parent=0
    #allocation2 [shape = 'u8[32768]{0}', space=vmem, size = 0x8000, scoped, tag = 'input window, operand 7, single buffered']
    #allocation3 [shape = 's32[2]{0}', space=sflag, size = 0x8, scoped, tag = 'scoped memory for three_layer_pca_forward.1']
    #allocation4 [shape = 'u8[32768]{0}', space=vmem, size = 0x8000, scoped, tag = 'input window, operand 9, single buffered']
    #allocation5 [shape = 's32[1]{0}', space=sflag, size = 0x4, scoped, tag = 'scoped memory for three_layer_pca_forward.1']
    #allocation6 [shape = 'u8[32768]{0}', space=vmem, size = 0x8000, scoped, tag = 'input window, operand 11, single buffered']
    %18 = vsyncpa [#allocation3], 0
    %19 = vsyncpa [#allocation5], 0
    loop: start=0, step=1, limit=4
    $region2: #{three_layer_pca_forward.1} parent=1 // loop_pre_header
      _
    $region3: #{three_layer_pca_forward.1} parent=1 // loop_header
      %s21 = sphi 0, %s25
      %p22 = scmp.ge.s32.totalorder %s21, 4
      %s31 = sphi 0, %s33
      %s34 = sphi 0, %s31
      %s35 = sphi 0, %s34
      %s51 = sphi 0, %s35
      %s55 = sphi 0, %s55
      %s57 = sphi 0, %s55
      %s58 = sphi 0, %s57
      %s72 = sphi 0, %s58
      %s76 = sphi 0, %s76
      %s78 = sphi 0, %s76
      %s79 = sphi 0, %s78
      %s93 = sphi 0, %s79
      %s97 = sphi 0, %s97
      %s99 = sphi 0, %s97
      %s100 = sphi 0, %s99
      %s114 = sphi 0, %s100
      %s118 = sphi 0, %s118
      %s120 = sphi 0, %s118
      %s121 = sphi 0, %s120
      %s135 = sphi 0, %s121
      %s139 = sphi 0, %s139
      %s141 = sphi 0, %s139
      %s142 = sphi 0, %s141
      %s156 = sphi 0, %s142
      %s160 = sphi 0, %s160
      %s162 = sphi 0, %s160
      %s163 = sphi 0, %s162
      %s177 = sphi 0, %s163
      %s181 = sphi 0, %s181
      %s183 = sphi 0, %s181
      %s184 = sphi 0, %s183
      %s198 = sphi 0, %s184
      %s202 = sphi 0, %s202
      %s204 = sphi 0, %s202
      %s205 = sphi 0, %s204
      %s219 = sphi 0, %s205
      %s223 = sphi 0, %s223
      %s225 = sphi 0, %s223
      %s226 = sphi 0, %s225
      %s240 = sphi 0, %s226
      %s244 = sphi 0, %s244
      %s246 = sphi 0, %s244
      %s247 = sphi 0, %s246
      %s261 = sphi 0, %s247
      %s265 = sphi 0, %s265
      %s267 = sphi 0, %s265
      %s268 = sphi 0, %s267
      %s282 = sphi 0, %s268
      %s286 = sphi 0, %s286
      %s288 = sphi 0, %s286
      %s289 = sphi 0, %s288
      %s303 = sphi 0, %s289
      %s309 = sphi 0, %s311
      %s312 = sphi 0, %s309
      %s313 = sphi 0, %s312
      %s329 = sphi 0, %s313
    $region4: #{three_layer_pca_forward.1} parent=1 // loop_header_branch
      %24 = sbr.rel (%p22) target = $region8
    $region5: #{three_layer_pca_forward.1} parent=1 // loop_body
      %s26 = ssub.s32 %s21, 1
      %s27 = ssub.s32 %s21, 2
      %s28 = sadd.s32 %s21, 1
      %s29 = ssub.s32 %s21, %s28
      %p30 = scmp.eq.s32.totalorder %s29, 0
      %s32 = sadd.s32 %s31, 1
      %s33 = scalar_select %p30, %s31, %s32
      %p36 = pneg %p30
      %p37 = scmp.eq.s32.totalorder %s21, 1
      %p38 = por %p36, %p37
      %p39 = scmp.ne.s32.totalorder %s31, %s34
      %p40 = scmp.eq.s32.totalorder %s21, 0
      %p41 = por %p39, %p40
      %p42 = scmp.ne.s32.totalorder %s31, %s34
      %p43 = scmp.eq.s32.totalorder %s26, 1
      %p44 = por %p42, %p43
      %p45 = scmp.ne.s32.totalorder %s34, %s35
      %p46 = scmp.eq.s32.totalorder %s26, 0
      %p47 = por %p45, %p46
      %p48 = scmp.ne.s32.totalorder %s34, %s35
      %p49 = scmp.eq.s32.totalorder %s27, 1
      %p50 = por %p48, %p49
      %p52 = scmp.ne.s32.totalorder %s35, %s51
      %p53 = scmp.eq.s32.totalorder %s27, 0
      %p54 = por %p52, %p53
      %s56 = sadd.s32 %s55, 1
      %p59 = scmp.eq.s32.totalorder %s21, 1
      %p60 = scmp.ne.s32.totalorder %s55, %s57
      %p61 = scmp.eq.s32.totalorder %s21, 0
      %p62 = por %p60, %p61
      %p63 = scmp.ne.s32.totalorder %s55, %s57
      %p64 = scmp.eq.s32.totalorder %s26, 1
      %p65 = por %p63, %p64
      %p66 = scmp.ne.s32.totalorder %s57, %s58
      %p67 = scmp.eq.s32.totalorder %s26, 0
      %p68 = por %p66, %p67
      %p69 = scmp.ne.s32.totalorder %s57, %s58
      %p70 = scmp.eq.s32.totalorder %s27, 1
      %p71 = por %p69, %p70
      %p73 = scmp.ne.s32.totalorder %s58, %s72
      %p74 = scmp.eq.s32.totalorder %s27, 0
      %p75 = por %p73, %p74
      %s77 = sadd.s32 %s76, 1
      %p80 = scmp.eq.s32.totalorder %s21, 1
      %p81 = scmp.ne.s32.totalorder %s76, %s78
      %p82 = scmp.eq.s32.totalorder %s21, 0
      %p83 = por %p81, %p82
      %p84 = scmp.ne.s32.totalorder %s76, %s78
      %p85 = scmp.eq.s32.totalorder %s26, 1
      %p86 = por %p84, %p85
      %p87 = scmp.ne.s32.totalorder %s78, %s79
      %p88 = scmp.eq.s32.totalorder %s26, 0
      %p89 = por %p87, %p88
      %p90 = scmp.ne.s32.totalorder %s78, %s79
      %p91 = scmp.eq.s32.totalorder %s27, 1
      %p92 = por %p90, %p91
      %p94 = scmp.ne.s32.totalorder %s79, %s93
      %p95 = scmp.eq.s32.totalorder %s27, 0
      %p96 = por %p94, %p95
      %s98 = sadd.s32 %s97, 1
      %p101 = scmp.eq.s32.totalorder %s21, 1
      %p102 = scmp.ne.s32.totalorder %s97, %s99
      %p103 = scmp.eq.s32.totalorder %s21, 0
      %p104 = por %p102, %p103
      %p105 = scmp.ne.s32.totalorder %s97, %s99
      %p106 = scmp.eq.s32.totalorder %s26, 1
      %p107 = por %p105, %p106
      %p108 = scmp.ne.s32.totalorder %s99, %s100
      %p109 = scmp.eq.s32.totalorder %s26, 0
      %p110 = por %p108, %p109
      %p111 = scmp.ne.s32.totalorder %s99, %s100
      %p112 = scmp.eq.s32.totalorder %s27, 1
      %p113 = por %p111, %p112
      %p115 = scmp.ne.s32.totalorder %s100, %s114
      %p116 = scmp.eq.s32.totalorder %s27, 0
      %p117 = por %p115, %p116
      %s119 = sadd.s32 %s118, 1
      %p122 = scmp.eq.s32.totalorder %s21, 1
      %p123 = scmp.ne.s32.totalorder %s118, %s120
      %p124 = scmp.eq.s32.totalorder %s21, 0
      %p125 = por %p123, %p124
      %p126 = scmp.ne.s32.totalorder %s118, %s120
      %p127 = scmp.eq.s32.totalorder %s26, 1
      %p128 = por %p126, %p127
      %p129 = scmp.ne.s32.totalorder %s120, %s121
      %p130 = scmp.eq.s32.totalorder %s26, 0
      %p131 = por %p129, %p130
      %p132 = scmp.ne.s32.totalorder %s120, %s121
      %p133 = scmp.eq.s32.totalorder %s27, 1
      %p134 = por %p132, %p133
      %p136 = scmp.ne.s32.totalorder %s121, %s135
      %p137 = scmp.eq.s32.totalorder %s27, 0
      %p138 = por %p136, %p137
      %s140 = sadd.s32 %s139, 1
      %p143 = scmp.eq.s32.totalorder %s21, 1
      %p144 = scmp.ne.s32.totalorder %s139, %s141
      %p145 = scmp.eq.s32.totalorder %s21, 0
      %p146 = por %p144, %p145
      %p147 = scmp.ne.s32.totalorder %s139, %s141
      %p148 = scmp.eq.s32.totalorder %s26, 1
      %p149 = por %p147, %p148
      %p150 = scmp.ne.s32.totalorder %s141, %s142
      %p151 = scmp.eq.s32.totalorder %s26, 0
      %p152 = por %p150, %p151
      %p153 = scmp.ne.s32.totalorder %s141, %s142
      %p154 = scmp.eq.s32.totalorder %s27, 1
      %p155 = por %p153, %p154
      %p157 = scmp.ne.s32.totalorder %s142, %s156
      %p158 = scmp.eq.s32.totalorder %s27, 0
      %p159 = por %p157, %p158
      %s161 = sadd.s32 %s160, 1
      %p164 = scmp.eq.s32.totalorder %s21, 1
      %p165 = scmp.ne.s32.totalorder %s160, %s162
      %p166 = scmp.eq.s32.totalorder %s21, 0
      %p167 = por %p165, %p166
      %p168 = scmp.ne.s32.totalorder %s160, %s162
      %p169 = scmp.eq.s32.totalorder %s26, 1
      %p170 = por %p168, %p169
      %p171 = scmp.ne.s32.totalorder %s162, %s163
      %p172 = scmp.eq.s32.totalorder %s26, 0
      %p173 = por %p171, %p172
      %p174 = scmp.ne.s32.totalorder %s162, %s163
      %p175 = scmp.eq.s32.totalorder %s27, 1
      %p176 = por %p174, %p175
      %p178 = scmp.ne.s32.totalorder %s163, %s177
      %p179 = scmp.eq.s32.totalorder %s27, 0
      %p180 = por %p178, %p179
      %s182 = sadd.s32 %s181, 1
      %p185 = scmp.eq.s32.totalorder %s21, 1
      %p186 = scmp.ne.s32.totalorder %s181, %s183
      %p187 = scmp.eq.s32.totalorder %s21, 0
      %p188 = por %p186, %p187
      %p189 = scmp.ne.s32.totalorder %s181, %s183
      %p190 = scmp.eq.s32.totalorder %s26, 1
      %p191 = por %p189, %p190
      %p192 = scmp.ne.s32.totalorder %s183, %s184
      %p193 = scmp.eq.s32.totalorder %s26, 0
      %p194 = por %p192, %p193
      %p195 = scmp.ne.s32.totalorder %s183, %s184
      %p196 = scmp.eq.s32.totalorder %s27, 1
      %p197 = por %p195, %p196
      %p199 = scmp.ne.s32.totalorder %s184, %s198
      %p200 = scmp.eq.s32.totalorder %s27, 0
      %p201 = por %p199, %p200
      %s203 = sadd.s32 %s202, 1
      %p206 = scmp.eq.s32.totalorder %s21, 1
      %p207 = scmp.ne.s32.totalorder %s202, %s204
      %p208 = scmp.eq.s32.totalorder %s21, 0
      %p209 = por %p207, %p208
      %p210 = scmp.ne.s32.totalorder %s202, %s204
      %p211 = scmp.eq.s32.totalorder %s26, 1
      %p212 = por %p210, %p211
      %p213 = scmp.ne.s32.totalorder %s204, %s205
      %p214 = scmp.eq.s32.totalorder %s26, 0
      %p215 = por %p213, %p214
      %p216 = scmp.ne.s32.totalorder %s204, %s205
      %p217 = scmp.eq.s32.totalorder %s27, 1
      %p218 = por %p216, %p217
      %p220 = scmp.ne.s32.totalorder %s205, %s219
      %p221 = scmp.eq.s32.totalorder %s27, 0
      %p222 = por %p220, %p221
      %s224 = sadd.s32 %s223, 1
      %p227 = scmp.eq.s32.totalorder %s21, 1
      %p228 = scmp.ne.s32.totalorder %s223, %s225
      %p229 = scmp.eq.s32.totalorder %s21, 0
      %p230 = por %p228, %p229
      %p231 = scmp.ne.s32.totalorder %s223, %s225
      %p232 = scmp.eq.s32.totalorder %s26, 1
      %p233 = por %p231, %p232
      %p234 = scmp.ne.s32.totalorder %s225, %s226
      %p235 = scmp.eq.s32.totalorder %s26, 0
      %p236 = por %p234, %p235
      %p237 = scmp.ne.s32.totalorder %s225, %s226
      %p238 = scmp.eq.s32.totalorder %s27, 1
      %p239 = por %p237, %p238
      %p241 = scmp.ne.s32.totalorder %s226, %s240
      %p242 = scmp.eq.s32.totalorder %s27, 0
      %p243 = por %p241, %p242
      %s245 = sadd.s32 %s244, 1
      %p248 = scmp.eq.s32.totalorder %s21, 1
      %p249 = scmp.ne.s32.totalorder %s244, %s246
      %p250 = scmp.eq.s32.totalorder %s21, 0
      %p251 = por %p249, %p250
      %p252 = scmp.ne.s32.totalorder %s244, %s246
      %p253 = scmp.eq.s32.totalorder %s26, 1
      %p254 = por %p252, %p253
      %p255 = scmp.ne.s32.totalorder %s246, %s247
      %p256 = scmp.eq.s32.totalorder %s26, 0
      %p257 = por %p255, %p256
      %p258 = scmp.ne.s32.totalorder %s246, %s247
      %p259 = scmp.eq.s32.totalorder %s27, 1
      %p260 = por %p258, %p259
      %p262 = scmp.ne.s32.totalorder %s247, %s261
      %p263 = scmp.eq.s32.totalorder %s27, 0
      %p264 = por %p262, %p263
      %s266 = sadd.s32 %s265, 1
      %p269 = scmp.eq.s32.totalorder %s21, 1
      %p270 = scmp.ne.s32.totalorder %s265, %s267
      %p271 = scmp.eq.s32.totalorder %s21, 0
      %p272 = por %p270, %p271
      %p273 = scmp.ne.s32.totalorder %s265, %s267
      %p274 = scmp.eq.s32.totalorder %s26, 1
      %p275 = por %p273, %p274
      %p276 = scmp.ne.s32.totalorder %s267, %s268
      %p277 = scmp.eq.s32.totalorder %s26, 0
      %p278 = por %p276, %p277
      %p279 = scmp.ne.s32.totalorder %s267, %s268
      %p280 = scmp.eq.s32.totalorder %s27, 1
      %p281 = por %p279, %p280
      %p283 = scmp.ne.s32.totalorder %s268, %s282
      %p284 = scmp.eq.s32.totalorder %s27, 0
      %p285 = por %p283, %p284
      %s287 = sadd.s32 %s286, 1
      %p290 = scmp.eq.s32.totalorder %s21, 1
      %p291 = scmp.ne.s32.totalorder %s286, %s288
      %p292 = scmp.eq.s32.totalorder %s21, 0
      %p293 = por %p291, %p292
      %p294 = scmp.ne.s32.totalorder %s286, %s288
      %p295 = scmp.eq.s32.totalorder %s26, 1
      %p296 = por %p294, %p295
      %p297 = scmp.ne.s32.totalorder %s288, %s289
      %p298 = scmp.eq.s32.totalorder %s26, 0
      %p299 = por %p297, %p298
      %p300 = scmp.ne.s32.totalorder %s288, %s289
      %p301 = scmp.eq.s32.totalorder %s27, 1
      %p302 = por %p300, %p301
      %p304 = scmp.ne.s32.totalorder %s289, %s303
      %p305 = scmp.eq.s32.totalorder %s27, 0
      %p306 = por %p304, %p305
      %s307 = ssub.s32 %s21, %s28
      %p308 = scmp.eq.s32.totalorder %s307, 0
      %s310 = sadd.s32 %s309, 1
      %s311 = scalar_select %p308, %s309, %s310
      %p314 = pneg %p308
      %p315 = scmp.eq.s32.totalorder %s21, 1
      %p316 = por %p314, %p315
      %p317 = scmp.ne.s32.totalorder %s309, %s312
      %p318 = scmp.eq.s32.totalorder %s21, 0
      %p319 = por %p317, %p318
      %p320 = scmp.ne.s32.totalorder %s309, %s312
      %p321 = scmp.eq.s32.totalorder %s26, 1
      %p322 = por %p320, %p321
      %p323 = scmp.ne.s32.totalorder %s312, %s313
      %p324 = scmp.eq.s32.totalorder %s26, 0
      %p325 = por %p323, %p324
      %p326 = scmp.ne.s32.totalorder %s312, %s313
      %p327 = scmp.eq.s32.totalorder %s27, 1
      %p328 = por %p326, %p327
      %p330 = scmp.ne.s32.totalorder %s313, %s329
      %p331 = scmp.eq.s32.totalorder %s27, 0
      %p332 = por %p330, %p331
      %p333 = scmp.le.s32.totalorder 1, %s21
      %p334 = scmp.lt.s32.totalorder %s21, 3
      %p335 = pnand %p333, %p334
      %p336 = pneg %p335
      // Predicated region
      $region9: #{three_layer_pca_forward.1} parent=5 // pred_check
        _
      $region10: #{three_layer_pca_forward.1} parent=5 // pred_check_branch
        %338 = sbr.rel (%p335) target = $region12
      $region11: #{three_layer_pca_forward.1} parent=5 // pred_region
        %s339 = ssub.s32 %s21, 1
        // Predicated region
        $region13: #{three_layer_pca_forward.1} parent=11 // pred_check
          %p340 = pneg %p68
        $region14: #{three_layer_pca_forward.1} parent=11 // pred_check_branch
          %342 = sbr.rel (%p340) target = $region16
        $region15: #{three_layer_pca_forward.1} parent=11 // pred_region
          _
        $region16: #{three_layer_pca_forward.1} parent=11 // pred_fallthru
          _
        // Predicated region
        $region17: #{three_layer_pca_forward.1} parent=11 // pred_check
          %p343 = pneg %p89
        $region18: #{three_layer_pca_forward.1} parent=11 // pred_check_branch
          %345 = sbr.rel (%p343) target = $region20
        $region19: #{three_layer_pca_forward.1} parent=11 // pred_region
          _
        $region20: #{three_layer_pca_forward.1} parent=11 // pred_fallthru
          _
        // Predicated region
        $region21: #{three_layer_pca_forward.1} parent=11 // pred_check
          %p346 = pneg %p110
        $region22: #{three_layer_pca_forward.1} parent=11 // pred_check_branch
          %348 = sbr.rel (%p346) target = $region24
        $region23: #{three_layer_pca_forward.1} parent=11 // pred_region
          _
        $region24: #{three_layer_pca_forward.1} parent=11 // pred_fallthru
          _
        // Predicated region
        $region25: #{three_layer_pca_forward.1} parent=11 // pred_check
          %p349 = pneg %p131
        $region26: #{three_layer_pca_forward.1} parent=11 // pred_check_branch
          %351 = sbr.rel (%p349) target = $region28
        $region27: #{three_layer_pca_forward.1} parent=11 // pred_region
          _
        $region28: #{three_layer_pca_forward.1} parent=11 // pred_fallthru
          _
        // Predicated region
        $region29: #{three_layer_pca_forward.1} parent=11 // pred_check
          %p352 = pneg %p152
        $region30: #{three_layer_pca_forward.1} parent=11 // pred_check_branch
          %354 = sbr.rel (%p352) target = $region32
        $region31: #{three_layer_pca_forward.1} parent=11 // pred_region
          _
        $region32: #{three_layer_pca_forward.1} parent=11 // pred_fallthru
          _
        // Predicated region
        $region33: #{three_layer_pca_forward.1} parent=11 // pred_check
          %p355 = pneg %p173
        $region34: #{three_layer_pca_forward.1} parent=11 // pred_check_branch
          %357 = sbr.rel (%p355) target = $region36
        $region35: #{three_layer_pca_forward.1} parent=11 // pred_region
          _
        $region36: #{three_layer_pca_forward.1} parent=11 // pred_fallthru
          _
        // Predicated region
        $region37: #{three_layer_pca_forward.1} parent=11 // pred_check
          %p358 = pneg %p194
        $region38: #{three_layer_pca_forward.1} parent=11 // pred_check_branch
          %360 = sbr.rel (%p358) target = $region40
        $region39: #{three_layer_pca_forward.1} parent=11 // pred_region
          %s362 = ssub.s32 1024, 1024
          %363 = vsyncadd [#allocation3], %s362
          %s364 = sshll.u32 [#allocation2], 4
          %s365 = int_to_ptr.vmem [resolvable:$true] %s364
          %370 = dma.hbm_to_vmem [thread:$0]  %s7, 1024, %s365, [#allocation3], 64, 64, 4
        $region40: #{three_layer_pca_forward.1} parent=11 // pred_fallthru
          _
        // Predicated region
        $region41: #{three_layer_pca_forward.1} parent=11 // pred_check
          %p371 = pneg %p215
        $region42: #{three_layer_pca_forward.1} parent=11 // pred_check_branch
          %373 = sbr.rel (%p371) target = $region44
        $region43: #{three_layer_pca_forward.1} parent=11 // pred_region
          _
        $region44: #{three_layer_pca_forward.1} parent=11 // pred_fallthru
          _
        // Predicated region
        $region45: #{three_layer_pca_forward.1} parent=11 // pred_check
          %p374 = pneg %p236
        $region46: #{three_layer_pca_forward.1} parent=11 // pred_check_branch
          %376 = sbr.rel (%p374) target = $region48
        $region47: #{three_layer_pca_forward.1} parent=11 // pred_region
          %s378 = ssub.s32 1024, 1024
          %379 = vsyncadd [#allocation5], %s378
          %s380 = sshll.u32 [#allocation4], 4
          %s381 = int_to_ptr.vmem [resolvable:$true] %s380
          %386 = dma.hbm_to_vmem [thread:$0]  %s9, 1024, %s381, [#allocation5], 64, 64, 4
        $region48: #{three_layer_pca_forward.1} parent=11 // pred_fallthru
          _
        // Predicated region
        $region49: #{three_layer_pca_forward.1} parent=11 // pred_check
          %p387 = pneg %p257
        $region50: #{three_layer_pca_forward.1} parent=11 // pred_check_branch
          %389 = sbr.rel (%p387) target = $region52
        $region51: #{three_layer_pca_forward.1} parent=11 // pred_region
          _
        $region52: #{three_layer_pca_forward.1} parent=11 // pred_fallthru
          _
        // Predicated region
        $region53: #{three_layer_pca_forward.1} parent=11 // pred_check
          %p390 = pneg %p278
        $region54: #{three_layer_pca_forward.1} parent=11 // pred_check_branch
          %392 = sbr.rel (%p390) target = $region56
        $region55: #{three_layer_pca_forward.1} parent=11 // pred_region
          %s394 = ssub.s32 1024, 1024
          %395 = vsyncadd [#allocation5], %s394
          %s396 = sshll.u32 [#allocation6], 4
          %s397 = int_to_ptr.vmem [resolvable:$true] %s396
          %402 = dma.hbm_to_vmem [thread:$0]  %s11, 1024, %s397, [#allocation5], 64, 64, 4
        $region56: #{three_layer_pca_forward.1} parent=11 // pred_fallthru
          _
        // Predicated region
        $region57: #{three_layer_pca_forward.1} parent=11 // pred_check
          %p403 = pneg %p299
        $region58: #{three_layer_pca_forward.1} parent=11 // pred_check_branch
          %405 = sbr.rel (%p403) target = $region60
        $region59: #{three_layer_pca_forward.1} parent=11 // pred_region
          _
        $region60: #{three_layer_pca_forward.1} parent=11 // pred_fallthru
          _
      $region12: #{three_layer_pca_forward.1} parent=5 // pred_fallthru
        _
      %p406 = scmp.lt.s32.totalorder %s21, 2
      // Predicated region
      $region61: #{three_layer_pca_forward.1} parent=5 // pred_check
        %p407 = pneg %p406
      $region62: #{three_layer_pca_forward.1} parent=5 // pred_check_branch
        %409 = sbr.rel (%p407) target = $region64
      $region63: #{three_layer_pca_forward.1} parent=5 // pred_region
        // Predicated region
        $region65: #{three_layer_pca_forward.1} parent=63 // pred_check
          %p410 = pneg %p41
        $region66: #{three_layer_pca_forward.1} parent=63 // pred_check_branch
          %412 = sbr.rel (%p410) target = $region68
        $region67: #{three_layer_pca_forward.1} parent=63 // pred_region
          %s413 = smul.u32 4, %s21
          %p414 = scmp.lt.s32.totalorder %s413, 7
          %s415 = scalar_select %p414, %s413, 7
          %s416 = smul.addr %s415, 4
          %s417 = scalar_lea.vmem %s0, %s416
          %s418 = smul.u32 4, %s21
        $region68: #{three_layer_pca_forward.1} parent=63 // pred_fallthru
          _
      $region64: #{three_layer_pca_forward.1} parent=5 // pred_fallthru
        _
      %p419 = scmp.le.s32.totalorder 1, %s21
      %p420 = scmp.lt.s32.totalorder %s21, 3
      %p421 = pnand %p419, %p420
      %p422 = pneg %p421
      // Predicated region
      $region69: #{three_layer_pca_forward.1} parent=5 // pred_check
        _
      $region70: #{three_layer_pca_forward.1} parent=5 // pred_check_branch
        %424 = sbr.rel (%p421) target = $region72
      $region71: #{three_layer_pca_forward.1} parent=5 // pred_region
        %s425 = ssub.s32 %s21, 1
        // Predicated region
        $region73: #{three_layer_pca_forward.1} parent=71 // pred_check
          %p426 = pneg %p194
        $region74: #{three_layer_pca_forward.1} parent=71 // pred_check_branch
          %428 = sbr.rel (%p426) target = $region76
        $region75: #{three_layer_pca_forward.1} parent=71 // pred_region
          %429 = dma.done [#allocation3], 1024
        $region76: #{three_layer_pca_forward.1} parent=71 // pred_fallthru
          _
        // Predicated region
        $region77: #{three_layer_pca_forward.1} parent=71 // pred_check
          %p430 = pneg %p236
        $region78: #{three_layer_pca_forward.1} parent=71 // pred_check_branch
          %432 = sbr.rel (%p430) target = $region80
        $region79: #{three_layer_pca_forward.1} parent=71 // pred_region
          %433 = dma.done [#allocation5], 1024
        $region80: #{three_layer_pca_forward.1} parent=71 // pred_fallthru
          _
        // Predicated region
        $region81: #{three_layer_pca_forward.1} parent=71 // pred_check
          %p434 = pneg %p278
        $region82: #{three_layer_pca_forward.1} parent=71 // pred_check_branch
          %436 = sbr.rel (%p434) target = $region84
        $region83: #{three_layer_pca_forward.1} parent=71 // pred_region
          %437 = dma.done [#allocation5], 1024
        $region84: #{three_layer_pca_forward.1} parent=71 // pred_fallthru
          _
        %s438 = smul.u32 4, %s26
        %p439 = scmp.lt.s32.totalorder %s438, 7
        %s440 = scalar_select %p439, %s438, 7
        %s441 = smul.addr %s440, 4
        %s442 = scalar_lea.vmem %s0, %s441
        %p443 = pneg %p47
        %p444 = pneg %p44
        %p445 = pneg %p68
        %p446 = pneg %p65
        %p447 = pneg %p89
        %p448 = pneg %p86
        %p449 = pneg %p110
        %p450 = pneg %p107
        %p451 = pneg %p131
        %p452 = pneg %p128
        %p453 = pneg %p152
        %p454 = pneg %p149
        %p455 = pneg %p173
        %p456 = pneg %p170
        %p457 = pneg %p194
        %p458 = pneg %p191
        %p459 = pneg %p215
        %p460 = pneg %p212
        %p461 = pneg %p236
        %p462 = pneg %p233
        %p463 = pneg %p257
        %p464 = pneg %p254
        %p465 = pneg %p278
        %p466 = pneg %p275
        %p467 = pneg %p299
        %p468 = pneg %p296
        %p469 = pneg %p325
        %p470 = pneg %p322
        %s471 = smul.u32 4, %s26
        %p472 = scmp.lt.s32.totalorder %s471, 7
        %s473 = scalar_select %p472, %s471, 7
        %s474 = smul.addr %s473, 8
        %s475 = scalar_lea.vmem %s13, %s474
        %s476 = smul.u32 4, %s26
        %p477 = scmp.lt.s32.totalorder %s476, 7
        %s478 = scalar_select %p477, %s476, 7
        %s479 = smul.addr %s478, 4
        %s480 = scalar_lea.vmem %s0, %s479
        %s481 = smul.u32 4, %s26
        %s482 = smul.u32 4, %s26
        %p483 = scmp.lt.s32.totalorder %s482, 7
        %s484 = scalar_select %p483, %s482, 7
        %s485 = smul.addr %s484, 8
        %s486 = scalar_lea.vmem %s13, %s485
        %s487 = smul.u32 4, %s26
        %v489 = vld [vmem:[%s480] sm:$0xf]
        %v490 = vld [vmem:[%s480 + $0x4] sm:$0xf]
        %v491 = vld [vmem:[%s480 + $0x8] sm:$0xf]
        %v492 = vld [vmem:[%s480 + $0xc] sm:$0xf]
        %v493 = vld [vmem:[%s1] sm:$0xf]
        %v494 = vld [vmem:[%s1 + $0x4] sm:$0xf]
        %v495 = vld [vmem:[%s1 + $0x8] sm:$0xf]
        %v496 = vld [vmem:[%s1 + $0xc] sm:$0xf]
        %v497 = vld [vmem:[%s1 + $0x10] sm:$0xf]
        %v498 = vld [vmem:[%s1 + $0x14] sm:$0xf]
        %v499 = vld [vmem:[%s1 + $0x18] sm:$0xf]
        %v500 = vld [vmem:[%s1 + $0x1c] sm:$0xf]
        %v501 = vld [vmem:[%s1 + $0x20] sm:$0xf]
        %v502 = vld [vmem:[%s1 + $0x24] sm:$0xf]
        %v503 = vld [vmem:[%s1 + $0x28] sm:$0xf]
        %v504 = vld [vmem:[%s1 + $0x2c] sm:$0xf]
        %v505 = vld [vmem:[%s1 + $0x30] sm:$0xf]
        %v506 = vld [vmem:[%s1 + $0x34] sm:$0xf]
        %v507 = vld [vmem:[%s1 + $0x38] sm:$0xf]
        %v508 = vld [vmem:[%s1 + $0x3c] sm:$0xf]
        %v509 = vld [vmem:[%s2] sm:$0x1]
        %v511 = vlaneseq
        %v512 = vshrl.u32 %v511, 7
        %v513 = vsub.s32 0, %v512
        %v514 = vrot.slane %v509, %v513
        %v520 = vunpack.c.l.b16 %v489
        %v521 = vunpack.c.l.b16 %v490
        %v522 = vunpack.c.l.b16 %v491
        %v523 = vunpack.c.l.b16 %v492
        %v524 = vpack.c.b16 %v521, %v520
        %v525 = vpack.c.b16 %v523, %v522
        %v544 = vunpack.c.l.b16 %v493
        %v545 = vunpack.c.l.b16 %v494
        %v546 = vunpack.c.l.b16 %v495
        %v547 = vunpack.c.l.b16 %v496
        %v548 = vunpack.c.l.b16 %v497
        %v549 = vunpack.c.l.b16 %v498
        %v550 = vunpack.c.l.b16 %v499
        %v551 = vunpack.c.l.b16 %v500
        %v552 = vunpack.c.l.b16 %v501
        %v553 = vunpack.c.l.b16 %v502
        %v554 = vunpack.c.l.b16 %v503
        %v555 = vunpack.c.l.b16 %v504
        %v556 = vunpack.c.l.b16 %v505
        %v557 = vunpack.c.l.b16 %v506
        %v558 = vunpack.c.l.b16 %v507
        %v559 = vunpack.c.l.b16 %v508
        %v560 = vpack.c.b16 %v545, %v544
        %v561 = vpack.c.b16 %v547, %v546
        %v562 = vpack.c.b16 %v549, %v548
        %v563 = vpack.c.b16 %v551, %v550
        %v564 = vpack.c.b16 %v553, %v552
        %v565 = vpack.c.b16 %v555, %v554
        %v566 = vpack.c.b16 %v557, %v556
        %v567 = vpack.c.b16 %v559, %v558
        %576 = vmatprep.subr.bf16.mxu0 0
        %577 = vmatpush1.bf16.msra.mxu0 %v560
        %578 = vmatprep.subr.bf16.mxu0 0
        %579 = vmatpush1.bf16.msra.mxu0 %v561
        %580 = vmatprep.subr.bf16.mxu0 0
        %581 = vmatpush1.bf16.msra.mxu0 %v562
        %582 = vmatprep.subr.bf16.mxu0 0
        %583 = vmatpush1.bf16.msra.mxu0 %v563
        %584 = vmatprep.subr.bf16.mxu0 0
        %585 = vmatpush1.bf16.msra.mxu0 %v564
        %586 = vmatprep.subr.bf16.mxu0 0
        %587 = vmatpush1.bf16.msra.mxu0 %v565
        %588 = vmatprep.subr.bf16.mxu0 0
        %589 = vmatpush1.bf16.msra.mxu0 %v566
        %590 = vmatprep.subr.bf16.mxu0 0
        %591 = vmatpush1.bf16.msra.mxu0 %v567
        %592 = vmatprep.subr.bf16.mxu0 0
        %593 = vmatpush1.bf16.msra.mxu0 0
        %594 = vmatprep.subr.bf16.mxu0 0
        %595 = vmatpush1.bf16.msra.mxu0 0
        %596 = vmatprep.subr.bf16.mxu0 0
        %597 = vmatpush1.bf16.msra.mxu0 0
        %598 = vmatprep.subr.bf16.mxu0 0
        %599 = vmatpush1.bf16.msra.mxu0 0
        %600 = vmatprep.subr.bf16.mxu0 0
        %601 = vmatpush1.bf16.msra.mxu0 0
        %602 = vmatprep.subr.bf16.mxu0 0
        %603 = vmatpush1.bf16.msra.mxu0 0
        %604 = vmatprep.subr.bf16.mxu0 0
        %605 = vmatpush1.bf16.msra.mxu0 0
        %606 = vmatprep.subr.bf16.mxu0 0
        %607 = vmatpush1.bf16.msra.mxu0 0
        %608 = vmatprep.mubr.bf16.mxu0 0
        %609 = vmatmul.mubr.bf16.gmra.mrb[0].mxu0 %v524
        %v610 = vpop.f32.mrb[0].mxu0
        %v611 = vadd.f32 %v514, %v610
        %v612 = vpop.f32.mrb[0].mxu0
        %v613 = vpop.f32.mrb[0].mxu0
        %v614 = vadd.f32 %v514, %v613
        %v615 = vpop.f32.mrb[0].mxu0
        %616 = vmatprep.mubr.bf16.mxu0 0
        %617 = vmatmul.mubr.bf16.gmra.mrb[0].mxu0 %v525
        %v618 = vpop.f32.mrb[0].mxu0
        %v619 = vadd.f32 %v514, %v618
        %v620 = vpop.f32.mrb[0].mxu0
        %v621 = vpop.f32.mrb[0].mxu0
        %v622 = vadd.f32 %v514, %v621
        %v623 = vpop.f32.mrb[0].mxu0
        %624 = vdwg.mxu0
        %v625 = vmax.f32 %v611, 0.0
        %v626 = vmax.f32 %v614, 0.0
        %v627 = vmax.f32 %v619, 0.0
        %v628 = vmax.f32 %v622, 0.0
        %v629 = vpack.c.bf16 %v626, %v625
        %v630 = vpack.c.bf16 %v628, %v627
        %v631 = vld [vmem:[%s3] sm:$0xf]
        %v632 = vld [vmem:[%s3 + $0x4] sm:$0xf]
        %v633 = vld [vmem:[%s3 + $0x8] sm:$0xf]
        %v634 = vld [vmem:[%s3 + $0xc] sm:$0xf]
        %v635 = vld [vmem:[%s3 + $0x10] sm:$0xf]
        %v636 = vld [vmem:[%s3 + $0x14] sm:$0xf]
        %v637 = vld [vmem:[%s3 + $0x18] sm:$0xf]
        %v638 = vld [vmem:[%s3 + $0x1c] sm:$0xf]
        %v639 = vld [vmem:[%s3 + $0x20] sm:$0xf]
        %v640 = vld [vmem:[%s3 + $0x24] sm:$0xf]
        %v641 = vld [vmem:[%s3 + $0x28] sm:$0xf]
        %v642 = vld [vmem:[%s3 + $0x2c] sm:$0xf]
        %v643 = vld [vmem:[%s3 + $0x30] sm:$0xf]
        %v644 = vld [vmem:[%s3 + $0x34] sm:$0xf]
        %v645 = vld [vmem:[%s3 + $0x38] sm:$0xf]
        %v646 = vld [vmem:[%s3 + $0x3c] sm:$0xf]
        %v647 = vld [vmem:[%s4] sm:$0x1]
        %v649 = vlaneseq
        %v650 = vshrl.u32 %v649, 7
        %v651 = vsub.s32 0, %v650
        %v652 = vrot.slane %v647, %v651
        %v670 = vunpack.c.l.b16 %v631
        %v671 = vunpack.c.l.b16 %v632
        %v672 = vunpack.c.l.b16 %v633
        %v673 = vunpack.c.l.b16 %v634
        %v674 = vunpack.c.l.b16 %v635
        %v675 = vunpack.c.l.b16 %v636
        %v676 = vunpack.c.l.b16 %v637
        %v677 = vunpack.c.l.b16 %v638
        %v678 = vunpack.c.l.b16 %v639
        %v679 = vunpack.c.l.b16 %v640
        %v680 = vunpack.c.l.b16 %v641
        %v681 = vunpack.c.l.b16 %v642
        %v682 = vunpack.c.l.b16 %v643
        %v683 = vunpack.c.l.b16 %v644
        %v684 = vunpack.c.l.b16 %v645
        %v685 = vunpack.c.l.b16 %v646
        %v686 = vpack.c.b16 %v671, %v670
        %v687 = vpack.c.b16 %v673, %v672
        %v688 = vpack.c.b16 %v675, %v674
        %v689 = vpack.c.b16 %v677, %v676
        %v690 = vpack.c.b16 %v679, %v678
        %v691 = vpack.c.b16 %v681, %v680
        %v692 = vpack.c.b16 %v683, %v682
        %v693 = vpack.c.b16 %v685, %v684
        %702 = vmatprep.subr.bf16.mxu0 0
        %703 = vmatpush1.bf16.msra.mxu0 %v686
        %704 = vmatprep.subr.bf16.mxu0 0
        %705 = vmatpush1.bf16.msra.mxu0 %v687
        %706 = vmatprep.subr.bf16.mxu0 0
        %707 = vmatpush1.bf16.msra.mxu0 %v688
        %708 = vmatprep.subr.bf16.mxu0 0
        %709 = vmatpush1.bf16.msra.mxu0 %v689
        %710 = vmatprep.subr.bf16.mxu0 0
        %711 = vmatpush1.bf16.msra.mxu0 %v690
        %712 = vmatprep.subr.bf16.mxu0 0
        %713 = vmatpush1.bf16.msra.mxu0 %v691
        %714 = vmatprep.subr.bf16.mxu0 0
        %715 = vmatpush1.bf16.msra.mxu0 %v692
        %716 = vmatprep.subr.bf16.mxu0 0
        %717 = vmatpush1.bf16.msra.mxu0 %v693
        %718 = vmatprep.subr.bf16.mxu0 0
        %719 = vmatpush1.bf16.msra.mxu0 0
        %720 = vmatprep.subr.bf16.mxu0 0
        %721 = vmatpush1.bf16.msra.mxu0 0
        %722 = vmatprep.subr.bf16.mxu0 0
        %723 = vmatpush1.bf16.msra.mxu0 0
        %724 = vmatprep.subr.bf16.mxu0 0
        %725 = vmatpush1.bf16.msra.mxu0 0
        %726 = vmatprep.subr.bf16.mxu0 0
        %727 = vmatpush1.bf16.msra.mxu0 0
        %728 = vmatprep.subr.bf16.mxu0 0
        %729 = vmatpush1.bf16.msra.mxu0 0
        %730 = vmatprep.subr.bf16.mxu0 0
        %731 = vmatpush1.bf16.msra.mxu0 0
        %732 = vmatprep.subr.bf16.mxu0 0
        %733 = vmatpush1.bf16.msra.mxu0 0
        %734 = vmatprep.mubr.bf16.mxu0 0
        %735 = vmatmul.mubr.bf16.gmra.mrb[0].mxu0 %v629
        %v736 = vpop.f32.mrb[0].mxu0
        %v737 = vadd.f32 %v652, %v736
        %v738 = vpop.f32.mrb[0].mxu0
        %v739 = vpop.f32.mrb[0].mxu0
        %v740 = vadd.f32 %v652, %v739
        %v741 = vpop.f32.mrb[0].mxu0
        %742 = vmatprep.mubr.bf16.mxu0 0
        %743 = vmatmul.mubr.bf16.gmra.mrb[0].mxu0 %v630
        %v744 = vpop.f32.mrb[0].mxu0
        %v745 = vadd.f32 %v652, %v744
        %v746 = vpop.f32.mrb[0].mxu0
        %v747 = vpop.f32.mrb[0].mxu0
        %v748 = vadd.f32 %v652, %v747
        %v749 = vpop.f32.mrb[0].mxu0
        %750 = vdwg.mxu0
        %v751 = vmax.f32 %v737, 0.0
        %v752 = vmax.f32 %v740, 0.0
        %v753 = vmax.f32 %v745, 0.0
        %v754 = vmax.f32 %v748, 0.0
        %v755 = vpack.c.bf16 %v752, %v751
        %v756 = vpack.c.bf16 %v754, %v753
        %v757 = vld [vmem:[%s5] sm:$0xf]
        %v758 = vld [vmem:[%s5 + $0x4] sm:$0xf]
        %v759 = vld [vmem:[%s5 + $0x8] sm:$0xf]
        %v760 = vld [vmem:[%s5 + $0xc] sm:$0xf]
        %v761 = vld [vmem:[%s5 + $0x10] sm:$0xf]
        %v762 = vld [vmem:[%s5 + $0x14] sm:$0xf]
        %v763 = vld [vmem:[%s5 + $0x18] sm:$0xf]
        %v764 = vld [vmem:[%s5 + $0x1c] sm:$0xf]
        %v765 = vld [vmem:[%s5 + $0x20] sm:$0xf]
        %v766 = vld [vmem:[%s5 + $0x24] sm:$0xf]
        %v767 = vld [vmem:[%s5 + $0x28] sm:$0xf]
        %v768 = vld [vmem:[%s5 + $0x2c] sm:$0xf]
        %v769 = vld [vmem:[%s5 + $0x30] sm:$0xf]
        %v770 = vld [vmem:[%s5 + $0x34] sm:$0xf]
        %v771 = vld [vmem:[%s5 + $0x38] sm:$0xf]
        %v772 = vld [vmem:[%s5 + $0x3c] sm:$0xf]
        %v773 = vld [vmem:[%s6] sm:$0x1]
        %v775 = vlaneseq
        %v776 = vshrl.u32 %v775, 7
        %v777 = vsub.s32 0, %v776
        %v778 = vrot.slane %v773, %v777
        %v796 = vunpack.c.l.b16 %v757
        %v797 = vunpack.c.l.b16 %v758
        %v798 = vunpack.c.l.b16 %v759
        %v799 = vunpack.c.l.b16 %v760
        %v800 = vunpack.c.l.b16 %v761
        %v801 = vunpack.c.l.b16 %v762
        %v802 = vunpack.c.l.b16 %v763
        %v803 = vunpack.c.l.b16 %v764
        %v804 = vunpack.c.l.b16 %v765
        %v805 = vunpack.c.l.b16 %v766
        %v806 = vunpack.c.l.b16 %v767
        %v807 = vunpack.c.l.b16 %v768
        %v808 = vunpack.c.l.b16 %v769
        %v809 = vunpack.c.l.b16 %v770
        %v810 = vunpack.c.l.b16 %v771
        %v811 = vunpack.c.l.b16 %v772
        %v812 = vpack.c.b16 %v797, %v796
        %v813 = vpack.c.b16 %v799, %v798
        %v814 = vpack.c.b16 %v801, %v800
        %v815 = vpack.c.b16 %v803, %v802
        %v816 = vpack.c.b16 %v805, %v804
        %v817 = vpack.c.b16 %v807, %v806
        %v818 = vpack.c.b16 %v809, %v808
        %v819 = vpack.c.b16 %v811, %v810
        %828 = vmatprep.subr.bf16.mxu0 0
        %829 = vmatpush1.bf16.msra.mxu0 %v812
        %830 = vmatprep.subr.bf16.mxu0 0
        %831 = vmatpush1.bf16.msra.mxu0 %v813
        %832 = vmatprep.subr.bf16.mxu0 0
        %833 = vmatpush1.bf16.msra.mxu0 %v814
        %834 = vmatprep.subr.bf16.mxu0 0
        %835 = vmatpush1.bf16.msra.mxu0 %v815
        %836 = vmatprep.subr.bf16.mxu0 0
        %837 = vmatpush1.bf16.msra.mxu0 %v816
        %838 = vmatprep.subr.bf16.mxu0 0
        %839 = vmatpush1.bf16.msra.mxu0 %v817
        %840 = vmatprep.subr.bf16.mxu0 0
        %841 = vmatpush1.bf16.msra.mxu0 %v818
        %842 = vmatprep.subr.bf16.mxu0 0
        %843 = vmatpush1.bf16.msra.mxu0 %v819
        %844 = vmatprep.subr.bf16.mxu0 0
        %845 = vmatpush1.bf16.msra.mxu0 0
        %846 = vmatprep.subr.bf16.mxu0 0
        %847 = vmatpush1.bf16.msra.mxu0 0
        %848 = vmatprep.subr.bf16.mxu0 0
        %849 = vmatpush1.bf16.msra.mxu0 0
        %850 = vmatprep.subr.bf16.mxu0 0
        %851 = vmatpush1.bf16.msra.mxu0 0
        %852 = vmatprep.subr.bf16.mxu0 0
        %853 = vmatpush1.bf16.msra.mxu0 0
        %854 = vmatprep.subr.bf16.mxu0 0
        %855 = vmatpush1.bf16.msra.mxu0 0
        %856 = vmatprep.subr.bf16.mxu0 0
        %857 = vmatpush1.bf16.msra.mxu0 0
        %858 = vmatprep.subr.bf16.mxu0 0
        %859 = vmatpush1.bf16.msra.mxu0 0
        %860 = vmatprep.mubr.bf16.mxu0 0
        %861 = vmatmul.mubr.bf16.gmra.mrb[0].mxu0 %v755
        %v862 = vpop.f32.mrb[0].mxu0
        %v863 = vadd.f32 %v778, %v862
        %v864 = vpop.f32.mrb[0].mxu0
        %v865 = vpop.f32.mrb[0].mxu0
        %v866 = vadd.f32 %v778, %v865
        %v867 = vpop.f32.mrb[0].mxu0
        %868 = vmatprep.mubr.bf16.mxu0 0
        %869 = vmatmul.mubr.bf16.gmra.mrb[0].mxu0 %v756
        %v870 = vpop.f32.mrb[0].mxu0
        %v871 = vadd.f32 %v778, %v870
        %v872 = vpop.f32.mrb[0].mxu0
        %v873 = vpop.f32.mrb[0].mxu0
        %v874 = vadd.f32 %v778, %v873
        %v875 = vpop.f32.mrb[0].mxu0
        %876 = vdwg.mxu0
        %v877 = vpack.c.bf16 %v866, %v863
        %v878 = vpack.c.bf16 %v874, %v871
        %v879 = vld [vmem:[#allocation2] sm:$0xf]
        %v880 = vld [vmem:[#allocation2 + $0x4] sm:$0xf]
        %v881 = vld [vmem:[#allocation2 + $0x8] sm:$0xf]
        %v882 = vld [vmem:[#allocation2 + $0xc] sm:$0xf]
        %v883 = vld [vmem:[#allocation2 + $0x10] sm:$0xf]
        %v884 = vld [vmem:[#allocation2 + $0x14] sm:$0xf]
        %v885 = vld [vmem:[#allocation2 + $0x18] sm:$0xf]
        %v886 = vld [vmem:[#allocation2 + $0x1c] sm:$0xf]
        %v887 = vld [vmem:[#allocation2 + $0x20] sm:$0xf]
        %v888 = vld [vmem:[#allocation2 + $0x24] sm:$0xf]
        %v889 = vld [vmem:[#allocation2 + $0x28] sm:$0xf]
        %v890 = vld [vmem:[#allocation2 + $0x2c] sm:$0xf]
        %v891 = vld [vmem:[#allocation2 + $0x30] sm:$0xf]
        %v892 = vld [vmem:[#allocation2 + $0x34] sm:$0xf]
        %v893 = vld [vmem:[#allocation2 + $0x38] sm:$0xf]
        %v894 = vld [vmem:[#allocation2 + $0x3c] sm:$0xf]
        %v895 = vld [vmem:[%s8] sm:$0x1]
        %v897 = vlaneseq
        %v898 = vshrl.u32 %v897, 7
        %v899 = vsub.s32 0, %v898
        %v900 = vrot.slane %v895, %v899
        %v918 = vunpack.c.l.b16 %v879
        %v919 = vunpack.c.l.b16 %v880
        %v920 = vunpack.c.l.b16 %v881
        %v921 = vunpack.c.l.b16 %v882
        %v922 = vunpack.c.l.b16 %v883
        %v923 = vunpack.c.l.b16 %v884
        %v924 = vunpack.c.l.b16 %v885
        %v925 = vunpack.c.l.b16 %v886
        %v926 = vunpack.c.l.b16 %v887
        %v927 = vunpack.c.l.b16 %v888
        %v928 = vunpack.c.l.b16 %v889
        %v929 = vunpack.c.l.b16 %v890
        %v930 = vunpack.c.l.b16 %v891
        %v931 = vunpack.c.l.b16 %v892
        %v932 = vunpack.c.l.b16 %v893
        %v933 = vunpack.c.l.b16 %v894
        %v934 = vpack.c.b16 %v919, %v918
        %v935 = vpack.c.b16 %v921, %v920
        %v936 = vpack.c.b16 %v923, %v922
        %v937 = vpack.c.b16 %v925, %v924
        %v938 = vpack.c.b16 %v927, %v926
        %v939 = vpack.c.b16 %v929, %v928
        %v940 = vpack.c.b16 %v931, %v930
        %v941 = vpack.c.b16 %v933, %v932
        %950 = vmatprep.subr.bf16.mxu0 0
        %951 = vmatpush1.bf16.msra.mxu0 %v934
        %952 = vmatprep.subr.bf16.mxu0 0
        %953 = vmatpush1.bf16.msra.mxu0 %v935
        %954 = vmatprep.subr.bf16.mxu0 0
        %955 = vmatpush1.bf16.msra.mxu0 %v936
        %956 = vmatprep.subr.bf16.mxu0 0
        %957 = vmatpush1.bf16.msra.mxu0 %v937
        %958 = vmatprep.subr.bf16.mxu0 0
        %959 = vmatpush1.bf16.msra.mxu0 %v938
        %960 = vmatprep.subr.bf16.mxu0 0
        %961 = vmatpush1.bf16.msra.mxu0 %v939
        %962 = vmatprep.subr.bf16.mxu0 0
        %963 = vmatpush1.bf16.msra.mxu0 %v940
        %964 = vmatprep.subr.bf16.mxu0 0
        %965 = vmatpush1.bf16.msra.mxu0 %v941
        %966 = vmatprep.subr.bf16.mxu0 0
        %967 = vmatpush1.bf16.msra.mxu0 0
        %968 = vmatprep.subr.bf16.mxu0 0
        %969 = vmatpush1.bf16.msra.mxu0 0
        %970 = vmatprep.subr.bf16.mxu0 0
        %971 = vmatpush1.bf16.msra.mxu0 0
        %972 = vmatprep.subr.bf16.mxu0 0
        %973 = vmatpush1.bf16.msra.mxu0 0
        %974 = vmatprep.subr.bf16.mxu0 0
        %975 = vmatpush1.bf16.msra.mxu0 0
        %976 = vmatprep.subr.bf16.mxu0 0
        %977 = vmatpush1.bf16.msra.mxu0 0
        %978 = vmatprep.subr.bf16.mxu0 0
        %979 = vmatpush1.bf16.msra.mxu0 0
        %980 = vmatprep.subr.bf16.mxu0 0
        %981 = vmatpush1.bf16.msra.mxu0 0
        %982 = vmatprep.mubr.bf16.mxu0 0
        %983 = vmatmul.mubr.bf16.gmra.mrb[0].mxu0 %v877
        %v984 = vpop.f32.mrb[0].mxu0
        %v985 = vadd.f32 %v900, %v984
        %v986 = vpop.f32.mrb[0].mxu0
        %v987 = vpop.f32.mrb[0].mxu0
        %v988 = vadd.f32 %v900, %v987
        %v989 = vpop.f32.mrb[0].mxu0
        %990 = vmatprep.mubr.bf16.mxu0 0
        %991 = vmatmul.mubr.bf16.gmra.mrb[0].mxu0 %v878
        %v992 = vpop.f32.mrb[0].mxu0
        %v993 = vadd.f32 %v900, %v992
        %v994 = vpop.f32.mrb[0].mxu0
        %v995 = vpop.f32.mrb[0].mxu0
        %v996 = vadd.f32 %v900, %v995
        %v997 = vpop.f32.mrb[0].mxu0
        %998 = vdwg.mxu0
        %v999 = vmax.f32 %v985, 0.0
        %v1000 = vmax.f32 %v988, 0.0
        %v1001 = vmax.f32 %v993, 0.0
        %v1002 = vmax.f32 %v996, 0.0
        %v1003 = vpack.c.bf16 %v1000, %v999
        %v1004 = vpack.c.bf16 %v1002, %v1001
        %v1005 = vld [vmem:[#allocation4] sm:$0xf]
        %v1006 = vld [vmem:[#allocation4 + $0x4] sm:$0xf]
        %v1007 = vld [vmem:[#allocation4 + $0x8] sm:$0xf]
        %v1008 = vld [vmem:[#allocation4 + $0xc] sm:$0xf]
        %v1009 = vld [vmem:[#allocation4 + $0x10] sm:$0xf]
        %v1010 = vld [vmem:[#allocation4 + $0x14] sm:$0xf]
        %v1011 = vld [vmem:[#allocation4 + $0x18] sm:$0xf]
        %v1012 = vld [vmem:[#allocation4 + $0x1c] sm:$0xf]
        %v1013 = vld [vmem:[#allocation4 + $0x20] sm:$0xf]
        %v1014 = vld [vmem:[#allocation4 + $0x24] sm:$0xf]
        %v1015 = vld [vmem:[#allocation4 + $0x28] sm:$0xf]
        %v1016 = vld [vmem:[#allocation4 + $0x2c] sm:$0xf]
        %v1017 = vld [vmem:[#allocation4 + $0x30] sm:$0xf]
        %v1018 = vld [vmem:[#allocation4 + $0x34] sm:$0xf]
        %v1019 = vld [vmem:[#allocation4 + $0x38] sm:$0xf]
        %v1020 = vld [vmem:[#allocation4 + $0x3c] sm:$0xf]
        %v1021 = vld [vmem:[%s10] sm:$0x1]
        %v1023 = vlaneseq
        %v1024 = vshrl.u32 %v1023, 7
        %v1025 = vsub.s32 0, %v1024
        %v1026 = vrot.slane %v1021, %v1025
        %v1044 = vunpack.c.l.b16 %v1005
        %v1045 = vunpack.c.l.b16 %v1006
        %v1046 = vunpack.c.l.b16 %v1007
        %v1047 = vunpack.c.l.b16 %v1008
        %v1048 = vunpack.c.l.b16 %v1009
        %v1049 = vunpack.c.l.b16 %v1010
        %v1050 = vunpack.c.l.b16 %v1011
        %v1051 = vunpack.c.l.b16 %v1012
        %v1052 = vunpack.c.l.b16 %v1013
        %v1053 = vunpack.c.l.b16 %v1014
        %v1054 = vunpack.c.l.b16 %v1015
        %v1055 = vunpack.c.l.b16 %v1016
        %v1056 = vunpack.c.l.b16 %v1017
        %v1057 = vunpack.c.l.b16 %v1018
        %v1058 = vunpack.c.l.b16 %v1019
        %v1059 = vunpack.c.l.b16 %v1020
        %v1060 = vpack.c.b16 %v1045, %v1044
        %v1061 = vpack.c.b16 %v1047, %v1046
        %v1062 = vpack.c.b16 %v1049, %v1048
        %v1063 = vpack.c.b16 %v1051, %v1050
        %v1064 = vpack.c.b16 %v1053, %v1052
        %v1065 = vpack.c.b16 %v1055, %v1054
        %v1066 = vpack.c.b16 %v1057, %v1056
        %v1067 = vpack.c.b16 %v1059, %v1058
        %1076 = vmatprep.subr.bf16.mxu0 0
        %1077 = vmatpush1.bf16.msra.mxu0 %v1060
        %1078 = vmatprep.subr.bf16.mxu0 0
        %1079 = vmatpush1.bf16.msra.mxu0 %v1061
        %1080 = vmatprep.subr.bf16.mxu0 0
        %1081 = vmatpush1.bf16.msra.mxu0 %v1062
        %1082 = vmatprep.subr.bf16.mxu0 0
        %1083 = vmatpush1.bf16.msra.mxu0 %v1063
        %1084 = vmatprep.subr.bf16.mxu0 0
        %1085 = vmatpush1.bf16.msra.mxu0 %v1064
        %1086 = vmatprep.subr.bf16.mxu0 0
        %1087 = vmatpush1.bf16.msra.mxu0 %v1065
        %1088 = vmatprep.subr.bf16.mxu0 0
        %1089 = vmatpush1.bf16.msra.mxu0 %v1066
        %1090 = vmatprep.subr.bf16.mxu0 0
        %1091 = vmatpush1.bf16.msra.mxu0 %v1067
        %1092 = vmatprep.subr.bf16.mxu0 0
        %1093 = vmatpush1.bf16.msra.mxu0 0
        %1094 = vmatprep.subr.bf16.mxu0 0
        %1095 = vmatpush1.bf16.msra.mxu0 0
        %1096 = vmatprep.subr.bf16.mxu0 0
        %1097 = vmatpush1.bf16.msra.mxu0 0
        %1098 = vmatprep.subr.bf16.mxu0 0
        %1099 = vmatpush1.bf16.msra.mxu0 0
        %1100 = vmatprep.subr.bf16.mxu0 0
        %1101 = vmatpush1.bf16.msra.mxu0 0
        %1102 = vmatprep.subr.bf16.mxu0 0
        %1103 = vmatpush1.bf16.msra.mxu0 0
        %1104 = vmatprep.subr.bf16.mxu0 0
        %1105 = vmatpush1.bf16.msra.mxu0 0
        %1106 = vmatprep.subr.bf16.mxu0 0
        %1107 = vmatpush1.bf16.msra.mxu0 0
        %1108 = vmatprep.mubr.bf16.mxu0 0
        %1109 = vmatmul.mubr.bf16.gmra.mrb[0].mxu0 %v1003
        %v1110 = vpop.f32.mrb[0].mxu0
        %v1111 = vadd.f32 %v1026, %v1110
        %v1112 = vpop.f32.mrb[0].mxu0
        %v1113 = vpop.f32.mrb[0].mxu0
        %v1114 = vadd.f32 %v1026, %v1113
        %v1115 = vpop.f32.mrb[0].mxu0
        %1116 = vmatprep.mubr.bf16.mxu0 0
        %1117 = vmatmul.mubr.bf16.gmra.mrb[0].mxu0 %v1004
        %v1118 = vpop.f32.mrb[0].mxu0
        %v1119 = vadd.f32 %v1026, %v1118
        %v1120 = vpop.f32.mrb[0].mxu0
        %v1121 = vpop.f32.mrb[0].mxu0
        %v1122 = vadd.f32 %v1026, %v1121
        %v1123 = vpop.f32.mrb[0].mxu0
        %1124 = vdwg.mxu0
        %v1125 = vmax.f32 %v1111, 0.0
        %v1126 = vmax.f32 %v1114, 0.0
        %v1127 = vmax.f32 %v1119, 0.0
        %v1128 = vmax.f32 %v1122, 0.0
        %v1129 = vpack.c.bf16 %v1126, %v1125
        %v1130 = vpack.c.bf16 %v1128, %v1127
        %v1131 = vld [vmem:[#allocation6] sm:$0xf]
        %v1132 = vld [vmem:[#allocation6 + $0x4] sm:$0xf]
        %v1133 = vld [vmem:[#allocation6 + $0x8] sm:$0xf]
        %v1134 = vld [vmem:[#allocation6 + $0xc] sm:$0xf]
        %v1135 = vld [vmem:[#allocation6 + $0x10] sm:$0xf]
        %v1136 = vld [vmem:[#allocation6 + $0x14] sm:$0xf]
        %v1137 = vld [vmem:[#allocation6 + $0x18] sm:$0xf]
        %v1138 = vld [vmem:[#allocation6 + $0x1c] sm:$0xf]
        %v1139 = vld [vmem:[#allocation6 + $0x20] sm:$0xf]
        %v1140 = vld [vmem:[#allocation6 + $0x24] sm:$0xf]
        %v1141 = vld [vmem:[#allocation6 + $0x28] sm:$0xf]
        %v1142 = vld [vmem:[#allocation6 + $0x2c] sm:$0xf]
        %v1143 = vld [vmem:[#allocation6 + $0x30] sm:$0xf]
        %v1144 = vld [vmem:[#allocation6 + $0x34] sm:$0xf]
        %v1145 = vld [vmem:[#allocation6 + $0x38] sm:$0xf]
        %v1146 = vld [vmem:[#allocation6 + $0x3c] sm:$0xf]
        %v1147 = vld [vmem:[%s12] sm:$0x1]
        %v1149 = vlaneseq
        %v1150 = vshrl.u32 %v1149, 7
        %v1151 = vsub.s32 0, %v1150
        %v1152 = vrot.slane %v1147, %v1151
        %v1170 = vunpack.c.l.b16 %v1131
        %v1171 = vunpack.c.l.b16 %v1132
        %v1172 = vunpack.c.l.b16 %v1133
        %v1173 = vunpack.c.l.b16 %v1134
        %v1174 = vunpack.c.l.b16 %v1135
        %v1175 = vunpack.c.l.b16 %v1136
        %v1176 = vunpack.c.l.b16 %v1137
        %v1177 = vunpack.c.l.b16 %v1138
        %v1178 = vunpack.c.l.b16 %v1139
        %v1179 = vunpack.c.l.b16 %v1140
        %v1180 = vunpack.c.l.b16 %v1141
        %v1181 = vunpack.c.l.b16 %v1142
        %v1182 = vunpack.c.l.b16 %v1143
        %v1183 = vunpack.c.l.b16 %v1144
        %v1184 = vunpack.c.l.b16 %v1145
        %v1185 = vunpack.c.l.b16 %v1146
        %v1186 = vpack.c.b16 %v1171, %v1170
        %v1187 = vpack.c.b16 %v1173, %v1172
        %v1188 = vpack.c.b16 %v1175, %v1174
        %v1189 = vpack.c.b16 %v1177, %v1176
        %v1190 = vpack.c.b16 %v1179, %v1178
        %v1191 = vpack.c.b16 %v1181, %v1180
        %v1192 = vpack.c.b16 %v1183, %v1182
        %v1193 = vpack.c.b16 %v1185, %v1184
        %1202 = vmatprep.subr.bf16.mxu0 0
        %1203 = vmatpush1.bf16.msra.mxu0 %v1186
        %1204 = vmatprep.subr.bf16.mxu0 0
        %1205 = vmatpush1.bf16.msra.mxu0 %v1187
        %1206 = vmatprep.subr.bf16.mxu0 0
        %1207 = vmatpush1.bf16.msra.mxu0 %v1188
        %1208 = vmatprep.subr.bf16.mxu0 0
        %1209 = vmatpush1.bf16.msra.mxu0 %v1189
        %1210 = vmatprep.subr.bf16.mxu0 0
        %1211 = vmatpush1.bf16.msra.mxu0 %v1190
        %1212 = vmatprep.subr.bf16.mxu0 0
        %1213 = vmatpush1.bf16.msra.mxu0 %v1191
        %1214 = vmatprep.subr.bf16.mxu0 0
        %1215 = vmatpush1.bf16.msra.mxu0 %v1192
        %1216 = vmatprep.subr.bf16.mxu0 0
        %1217 = vmatpush1.bf16.msra.mxu0 %v1193
        %1218 = vmatprep.subr.bf16.mxu0 0
        %1219 = vmatpush1.bf16.msra.mxu0 0
        %1220 = vmatprep.subr.bf16.mxu0 0
        %1221 = vmatpush1.bf16.msra.mxu0 0
        %1222 = vmatprep.subr.bf16.mxu0 0
        %1223 = vmatpush1.bf16.msra.mxu0 0
        %1224 = vmatprep.subr.bf16.mxu0 0
        %1225 = vmatpush1.bf16.msra.mxu0 0
        %1226 = vmatprep.subr.bf16.mxu0 0
        %1227 = vmatpush1.bf16.msra.mxu0 0
        %1228 = vmatprep.subr.bf16.mxu0 0
        %1229 = vmatpush1.bf16.msra.mxu0 0
        %1230 = vmatprep.subr.bf16.mxu0 0
        %1231 = vmatpush1.bf16.msra.mxu0 0
        %1232 = vmatprep.subr.bf16.mxu0 0
        %1233 = vmatpush1.bf16.msra.mxu0 0
        %1234 = vmatprep.mubr.bf16.mxu0 0
        %1235 = vmatmul.mubr.bf16.gmra.mrb[0].mxu0 %v1129
        %v1236 = vpop.f32.mrb[0].mxu0
        %v1237 = vadd.f32 %v1152, %v1236
        %v1238 = vpop.f32.mrb[0].mxu0
        %v1239 = vpop.f32.mrb[0].mxu0
        %v1240 = vadd.f32 %v1152, %v1239
        %v1241 = vpop.f32.mrb[0].mxu0
        %1242 = vmatprep.mubr.bf16.mxu0 0
        %1243 = vmatmul.mubr.bf16.gmra.mrb[0].mxu0 %v1130
        %v1244 = vpop.f32.mrb[0].mxu0
        %v1245 = vadd.f32 %v1152, %v1244
        %v1246 = vpop.f32.mrb[0].mxu0
        %v1247 = vpop.f32.mrb[0].mxu0
        %v1248 = vadd.f32 %v1152, %v1247
        %v1249 = vpop.f32.mrb[0].mxu0
        %1250 = vdwg.mxu0
        %1251 = vst [vmem:[%s486] sm:$0xff] %v1237
        %1252 = vst [vmem:[%s486 + $0x8] sm:$0xff] %v1240
        %1253 = vst [vmem:[%s486 + $0x10] sm:$0xff] %v1245
        %1254 = vst [vmem:[%s486 + $0x18] sm:$0xff] %v1248
        %s1255 = smul.u32 4, %s26
        %p1256 = scmp.lt.s32.totalorder %s1255, 7
        %s1257 = scalar_select %p1256, %s1255, 7
        %s1258 = smul.addr %s1257, 8
        %s1259 = scalar_lea.vmem %s13, %s1258
        // Predicated region
        $region85: #{three_layer_pca_forward.1} parent=71 // pred_check
          %p1260 = pneg %p322
        $region86: #{three_layer_pca_forward.1} parent=71 // pred_check_branch
          %1262 = sbr.rel (%p1260) target = $region88
        $region87: #{three_layer_pca_forward.1} parent=71 // pred_region
          %s1263 = smul.u32 4, %s26
        $region88: #{three_layer_pca_forward.1} parent=71 // pred_fallthru
          _
      $region72: #{three_layer_pca_forward.1} parent=5 // pred_fallthru
        _
      %p1264 = scmp.le.s32.totalorder 2, %s21
      // Predicated region
      $region89: #{three_layer_pca_forward.1} parent=5 // pred_check
        %p1265 = pneg %p1264
      $region90: #{three_layer_pca_forward.1} parent=5 // pred_check_branch
        %1267 = sbr.rel (%p1265) target = $region92
      $region91: #{three_layer_pca_forward.1} parent=5 // pred_region
        %s1268 = ssub.s32 %s21, 2
        // Predicated region
        $region93: #{three_layer_pca_forward.1} parent=91 // pred_check
          %p1269 = pneg %p328
        $region94: #{three_layer_pca_forward.1} parent=91 // pred_check_branch
          %1271 = sbr.rel (%p1269) target = $region96
        $region95: #{three_layer_pca_forward.1} parent=91 // pred_region
          %s1272 = smul.u32 4, %s27
          %p1273 = scmp.lt.s32.totalorder %s1272, 7
          %s1274 = scalar_select %p1273, %s1272, 7
          %s1275 = smul.addr %s1274, 8
          %s1276 = scalar_lea.vmem %s13, %s1275
        $region96: #{three_layer_pca_forward.1} parent=91 // pred_fallthru
          _
      $region92: #{three_layer_pca_forward.1} parent=5 // pred_fallthru
        _
    $region6: #{three_layer_pca_forward.1} parent=1 // loop_footer
      %s25 = sadd.s32 1, %s21
    $region7: #{three_layer_pca_forward.1} parent=1 // loop_footer_branch
      %20 = sbr.rel target = $region3
    $region8: #{three_layer_pca_forward.1} parent=1 // loop_exit
      _
    %1277 = vsyncpa [#allocation3], 1
    %s1278 = scalar_lea.sflag [#allocation3], 1
    %1279 = vsyncpa %s1278, 1
    %1280 = vsyncpa [#allocation5], 1

</llo_original>
